<compile_context>
chip_gen: v5e
topology: v5e:2x2
jax: 0.10.0
libtpu: 0.0.40
codegen_flags: <defaults>
</compile_context>

<pallas_src>
import functools
import math

import jax
import jax.numpy as jnp
from jax.experimental import pallas as pl
from jax.experimental.pallas import tpu as pltpu

_NEG_INF = -1e30     # large-negative instead of -inf (avoids inf-inf NaNs)


def _round_up(x, m):
    return ((x + m - 1) // m) * m


def _chip_config():
    """Per-TPU-generation tile sizes and scoped-VMEM budget."""
    kind = ""
    try:
        kind = jax.devices()[0].device_kind.lower()
    except Exception:   # pragma: no cover - defensive
        pass
    if "v7" in kind:
        # 64 MiB VMEM/TC, 3.2 TB/s HBM: roofline already met at tm~320; keep the
        # FFN working set small enough for the halved VMEM.
        return dict(tm=256, tn=512, thd=256, tm_head=512,
                    tq=256, tkv=128, ckv=1024, vmem=48 * 2**20)
    if "v6" in kind:
        # 918 TF/s / 1.28 TB/s: need tm >~ 720 to be MXU-bound; 128 MiB VMEM fits it.
        return dict(tm=768, tn=512, thd=512, tm_head=2048,
                    tq=512, tkv=128, ckv=1024, vmem=96 * 2**20)
    if "v5" in kind:
        # v5e is near its roofline at tm=256 / 128-wide MXU tiles.
        return dict(tm=256, tn=512, thd=512, tm_head=1024,
                    tq=128, tkv=128, ckv=1024, vmem=64 * 2**20)
    return dict(tm=512, tn=512, thd=512, tm_head=1024,
                tq=256, tkv=128, ckv=1024, vmem=48 * 2**20)


_CFG = _chip_config()


# ---------------------------------------------------------------------------
# Small tiling helpers
# ---------------------------------------------------------------------------

def _fit(dim, preferred):
    """Return (tile, padded_dim) for one tiled dimension."""
    if dim <= preferred:
        return dim, dim                       # full-dim block is always legal
    return preferred, _round_up(dim, preferred)


def _pad_axis(x, target, axis):
    pad = target - x.shape[axis]
    if pad == 0:
        return x
    widths = [(0, 0)] * x.ndim
    widths[axis] = (0, pad)
    return jnp.pad(x, widths)


def _head_block(n_heads, head_dim):
    """#heads per attention grid step (keeps head block lane-width <= 128)."""
    return math.gcd(n_heads, max(1, 128 // max(head_dim, 1)))


# ---------------------------------------------------------------------------
# Fused RMSNorm + linear
# ---------------------------------------------------------------------------

def _rmsnorm_matmul_kernel(x_ref, gamma_ref, w_ref, o_ref, xn_ref, *, eps):
    """out = rmsnorm(x) @ W.  The normalized row tile is computed once (j==0)
    and cached in VMEM scratch; the N axis re-uses it (marked 'arbitrary')."""
    @pl.when(pl.program_id(1) == 0)
    def _():
        x = x_ref[...].astype(jnp.float32)
        ms = jnp.mean(x * x, axis=-1, keepdims=True)
        xn = x * jax.lax.rsqrt(ms + eps) * gamma_ref[...].astype(jnp.float32)
        xn_ref[...] = xn.astype(xn_ref.dtype)

    o_ref[...] = jnp.dot(xn_ref[...], w_ref[...],
                         preferred_element_type=jnp.float32).astype(o_ref.dtype)


def rmsnorm_linear(x2d, gamma, w_t, eps, out_dtype, *, tm=None, tn=None):
    tm = _CFG["tm"] if tm is None else tm
    tn = _CFG["tn"] if tn is None else tn
    n, d = x2d.shape
    d2, dout = w_t.shape
    assert d == d2
    tm_, n_pad = _fit(n, tm)
    tn_, dout_pad = _fit(dout, tn)

    x_p = _pad_axis(x2d, n_pad, 0)
    w_p = _pad_axis(w_t, dout_pad, 1)        # no-op when weights pre-padded at init

    out = pl.pallas_call(
        functools.partial(_rmsnorm_matmul_kernel, eps=eps),
        out_shape=jax.ShapeDtypeStruct((n_pad, dout_pad), out_dtype),
        grid=(n_pad // tm_, dout_pad // tn_),
        in_specs=[pl.BlockSpec((tm_, d), lambda i, j: (i, 0)),
                  pl.BlockSpec((1, d), lambda i, j: (0, 0)),
                  pl.BlockSpec((d, tn_), lambda i, j: (0, j))],
        out_specs=pl.BlockSpec((tm_, tn_), lambda i, j: (i, j)),
        scratch_shapes=[pltpu.VMEM((tm_, d), jnp.bfloat16)],   # cached rmsnorm(x)
        compiler_params=pltpu.CompilerParams(
            # N axis must be 'arbitrary': the xn cache is initialized at j==0.
            dimension_semantics=("parallel", "arbitrary"),
            vmem_limit_bytes=_CFG["vmem"]),
    )(x_p, gamma.reshape(1, d), w_p)
    return out[:n, :dout]


# ---------------------------------------------------------------------------
# Linear with fused residual add
# ---------------------------------------------------------------------------

def _linear_residual_kernel(x_ref, w_ref, r_ref, o_ref):
    y = jnp.dot(x_ref[...], w_ref[...], preferred_element_type=jnp.float32)
    o_ref[...] = (y + r_ref[...].astype(jnp.float32)).astype(o_ref.dtype)


def linear_residual(x2d, w_t, residual, *, tm=None, tn=None):
    tm = _CFG["tm"] if tm is None else tm
    tn = _CFG["tn"] if tn is None else tn
    n, d_in = x2d.shape
    d_in2, d_out = w_t.shape
    assert d_in == d_in2 and residual.shape == (n, d_out)
    tm_, n_pad = _fit(n, tm)
    tn_, dout_pad = _fit(d_out, tn)

    x_p = _pad_axis(x2d, n_pad, 0)
    w_p = _pad_axis(w_t, dout_pad, 1)
    r_p = _pad_axis(_pad_axis(residual, n_pad, 0), dout_pad, 1)

    out = pl.pallas_call(
        _linear_residual_kernel,
        out_shape=jax.ShapeDtypeStruct((n_pad, dout_pad), residual.dtype),
        grid=(n_pad // tm_, dout_pad // tn_),
        in_specs=[pl.BlockSpec((tm_, d_in), lambda i, j: (i, 0)),
                  pl.BlockSpec((d_in, tn_), lambda i, j: (0, j)),
                  pl.BlockSpec((tm_, tn_), lambda i, j: (i, j))],
        out_specs=pl.BlockSpec((tm_, tn_), lambda i, j: (i, j)),
        compiler_params=pltpu.CompilerParams(
            dimension_semantics=("parallel", "parallel"),
            vmem_limit_bytes=_CFG["vmem"]),
    )(x_p, w_p, r_p)
    return out[:n, :d_out]


# ---------------------------------------------------------------------------
# Fused RMSNorm + SwiGLU FFN + residual (hidden dim tiled as a reduction)
# ---------------------------------------------------------------------------

def _ffn_kernel(x_ref, gamma_ref, w1_ref, w3_ref, w2_ref, o_ref,
                xn_ref, acc_ref, *, eps):
    k = pl.program_id(1)

    @pl.when(k == 0)
    def _():
        x = x_ref[...].astype(jnp.float32)
        ms = jnp.mean(x * x, axis=-1, keepdims=True)
        xn = x * jax.lax.rsqrt(ms + eps) * gamma_ref[...].astype(jnp.float32)
        xn_ref[...] = xn.astype(xn_ref.dtype)
        acc_ref[...] = jnp.zeros_like(acc_ref)

    xn = xn_ref[...]                                          # (tm, D) bf16
    h1 = jnp.dot(xn, w1_ref[...], preferred_element_type=jnp.float32)
    h3 = jnp.dot(xn, w3_ref[...], preferred_element_type=jnp.float32)
    # SiLU(h1)*h3 with the divide routed through pl.reciprocal (EUP, off the VALU).
    gate = h1 * pl.reciprocal(1.0 + jnp.exp(-h1), approx=False) * h3
    acc_ref[...] += jnp.dot(gate.astype(w2_ref.dtype), w2_ref[...],
                            preferred_element_type=jnp.float32)

    @pl.when(k == pl.num_programs(1) - 1)
    def _():
        o_ref[...] = (acc_ref[...] + x_ref[...].astype(jnp.float32)).astype(o_ref.dtype)


def swiglu_ffn(x2d, gamma, w1_t, w3_t, w2_t, eps, *, tm=None, thd=None):
    tm = _CFG["tm"] if tm is None else tm
    thd = _CFG["thd"] if thd is None else thd
    n, d = x2d.shape
    hd = w1_t.shape[1]
    tm_, n_pad = _fit(n, tm)
    thd_, hd_pad = _fit(hd, thd)

    x_p = _pad_axis(x2d, n_pad, 0)
    w1_p = _pad_axis(w1_t, hd_pad, 1)         # no-ops when pre-padded at init
    w3_p = _pad_axis(w3_t, hd_pad, 1)
    w2_p = _pad_axis(w2_t, hd_pad, 0)

    out = pl.pallas_call(
        functools.partial(_ffn_kernel, eps=eps),
        out_shape=jax.ShapeDtypeStruct((n_pad, d), x2d.dtype),
        grid=(n_pad // tm_, hd_pad // thd_),
        in_specs=[pl.BlockSpec((tm_, d), lambda i, k: (i, 0)),
                  pl.BlockSpec((1, d), lambda i, k: (0, 0)),
                  pl.BlockSpec((d, thd_), lambda i, k: (0, k)),
                  pl.BlockSpec((d, thd_), lambda i, k: (0, k)),
                  pl.BlockSpec((thd_, d), lambda i, k: (k, 0))],
        out_specs=pl.BlockSpec((tm_, d), lambda i, k: (i, 0)),
        scratch_shapes=[pltpu.VMEM((tm_, d), jnp.bfloat16),   # normalized x
                        pltpu.VMEM((tm_, d), jnp.float32)],   # fp32 accumulator
        compiler_params=pltpu.CompilerParams(
            dimension_semantics=("parallel", "arbitrary"),
            vmem_limit_bytes=_CFG["vmem"]),
    )(x_p, gamma.reshape(1, d), w1_p, w3_p, w2_p)
    return out[:n]


# ---------------------------------------------------------------------------
# Flash attention (causal), q/k/v/out in (B, S, H*Dh) layout
# ---------------------------------------------------------------------------

def _flash_attn_kernel(q_ref, k_ref, v_ref, o_ref, m_ref, l_ref, acc_ref,
                       *, tq, tkv, n_sub, dh, hblk, kv_len, start_pos):
    """Online-softmax attention.  Each grid step consumes one KV chunk of
    n_sub*tkv positions and statically unrolls over 128-ish wide sub-tiles and
    the heads in this head block.  q is pre-scaled by 1/sqrt(Dh)."""
    qi = pl.program_id(2)
    ci = pl.program_id(3)

    @pl.when(ci == 0)
    def _():
        m_ref[...] = jnp.full_like(m_ref, _NEG_INF)
        l_ref[...] = jnp.zeros_like(l_ref)
        acc_ref[...] = jnp.zeros_like(acc_ref)

    q_start = qi * tq
    q_last = q_start + (tq - 1) + start_pos            # last absolute query pos in tile
    chunk_start = ci * (n_sub * tkv)

    q_all = q_ref[...]                                  # (tq, hblk*dh)
    row = q_start + start_pos + jax.lax.broadcasted_iota(jnp.int32, (tq, tkv), 0)

    for sub in range(n_sub):
        kv0 = chunk_start + sub * tkv

        @pl.when(kv0 <= q_last)                         # skip fully-masked sub-tiles
        def _(sub=sub, kv0=kv0):
            k_sub = k_ref[sub * tkv:(sub + 1) * tkv, :]     # (tkv, hblk*dh)
            v_sub = v_ref[sub * tkv:(sub + 1) * tkv, :]
            col = kv0 + jax.lax.broadcasted_iota(jnp.int32, (tq, tkv), 1)
            keep = (col <= row) & (col < kv_len)            # causal + seq-pad mask

            for h in range(hblk):
                sl = slice(h * dh, (h + 1) * dh)
                q_h = q_all[:, sl]                          # (tq, dh)
                k_h = k_sub[:, sl]                          # (tkv, dh)
                s = jax.lax.dot_general(                    # q @ k^T without transpose
                    q_h, k_h, (((1,), (1,)), ((), ())),
                    preferred_element_type=jnp.float32)     # (tq, tkv)
                s = jnp.where(keep, s, _NEG_INF)

                m_prev = m_ref[:, h:h + 1]                  # (tq, 1)
                m_new = jnp.maximum(m_prev, jnp.max(s, axis=-1, keepdims=True))
                alpha = jnp.exp(m_prev - m_new)
                p = jnp.exp(s - m_new)
                l_ref[:, h:h + 1] = alpha * l_ref[:, h:h + 1] + \
                    jnp.sum(p, axis=-1, keepdims=True)
                acc_ref[:, sl] = alpha * acc_ref[:, sl] + jnp.dot(
                    p.astype(v_sub.dtype), v_sub[:, sl],
                    preferred_element_type=jnp.float32)
                m_ref[:, h:h + 1] = m_new

    @pl.when(ci == pl.num_programs(3) - 1)
    def _():
        for h in range(hblk):
            sl = slice(h * dh, (h + 1) * dh)
            acc_ref[:, sl] = acc_ref[:, sl] * pl.reciprocal(l_ref[:, h:h + 1],
                                                            approx=True)
        o_ref[...] = acc_ref[...].astype(o_ref.dtype)       # one lane-dense store


def flash_attention(q, k, v, *, n_heads, start_pos):
    """q, k, v: (B, S, n_heads*Dh); q pre-scaled by 1/sqrt(Dh).  Returns same shape."""
    b, s, d = q.shape
    dh = d // n_heads
    hblk = _head_block(n_heads, dh)
    hd = hblk * dh

    cfg = _CFG
    if s <= max(128, cfg["tq"]):
        tq = tkv = ckv = s                    # single tile; iota mask handles causality
        s_pad = s
    else:
        tq = cfg["tq"]
        tkv = cfg["tkv"]                      # tkv divides tq by construction
        s_pad = _round_up(s, tq)              # pad odd sequence lengths
        ckv = math.gcd(s_pad, cfg["ckv"])     # KV chunk per grid step (multiple of tkv)
    n_sub = ckv // tkv
    n_chunks = s_pad // ckv

    q_p = _pad_axis(q, s_pad, 1)
    k_p = _pad_axis(k, s_pad, 1)
    v_p = _pad_axis(v, s_pad, 1)

    def q_map(bi, hi, qi, ci):
        return (bi, qi, hi)

    def kv_map(bi, hi, qi, ci):
        # Clamp to the last causally-needed chunk so fully-masked chunks repeat
        # the previous block index and Pallas skips their DMA entirely.
        last = (qi * tq + tq - 1 + start_pos) // ckv
        return (bi, jnp.minimum(ci, last), hi)

    out = pl.pallas_call(
        functools.partial(_flash_attn_kernel, tq=tq, tkv=tkv, n_sub=n_sub,
                          dh=dh, hblk=hblk, kv_len=s, start_pos=start_pos),
        out_shape=jax.ShapeDtypeStruct((b, s_pad, d), q.dtype),
        grid=(b, n_heads // hblk, s_pad // tq, n_chunks),
        in_specs=[pl.BlockSpec((None, tq, hd), q_map),
                  pl.BlockSpec((None, ckv, hd), kv_map),
                  pl.BlockSpec((None, ckv, hd), kv_map)],
        out_specs=pl.BlockSpec((None, tq, hd), q_map),
        scratch_shapes=[pltpu.VMEM((tq, hblk), jnp.float32),   # running max per head
                        pltpu.VMEM((tq, hblk), jnp.float32),   # running denom per head
                        pltpu.VMEM((tq, hd), jnp.float32)],    # fp32 accumulator
        compiler_params=pltpu.CompilerParams(
            dimension_semantics=("parallel", "parallel", "parallel", "arbitrary"),
            vmem_limit_bytes=cfg["vmem"]),
    )(q_p, k_p, v_p)
    return out[:, :s, :]


# ---------------------------------------------------------------------------
# Plain-JAX glue (embedding gather, RoPE, parameter setup)
# ---------------------------------------------------------------------------

def precompute_freqs_cis(dim, end, theta=10000.0):
    freqs = 1.0 / (theta ** (jnp.arange(0, dim, 2)[: dim // 2].astype(jnp.float32) / dim))
    t = jnp.arange(end, dtype=jnp.float32)
    freqs = jnp.outer(t, freqs)                               # (end, dim//2)
    return jnp.cos(freqs), jnp.sin(freqs)


def apply_rotary_emb(x, cos, sin, scale=1.0):
    # x: (B, S, H, Dh); interleaved (even, odd) complex-pair rotation, matching
    # torch.polar semantics exactly.  `scale` folds 1/sqrt(Dh) into q here.
    # TODO(synk): fuse RoPE into the QKV projection kernel's epilogue.
    b, s, h, dh = x.shape
    xf = x.astype(jnp.float32).reshape(b, s, h, dh // 2, 2)
    xe, xo = xf[..., 0], xf[..., 1]
    c = cos.reshape(1, s, 1, dh // 2)
    si = sin.reshape(1, s, 1, dh // 2)
    oe = (xe * c - xo * si) * scale
    oo = (xe * si + xo * c) * scale
    return jnp.stack([oe, oo], axis=-1).reshape(b, s, h, dh).astype(x.dtype)


def ffn_hidden_dim(dim, multiple_of, ffn_dim_multiplier):
    hidden = 4 * dim
    hidden = int(2 * hidden / 3)
    if ffn_dim_multiplier is not None:
        hidden = int(ffn_dim_multiplier * hidden)
    hidden = multiple_of * ((hidden + multiple_of - 1) // multiple_of)
    return hidden


def init_params(key, vocab, dim, n_layers, multiple_of, ffn_dim_multiplier):
    hd = ffn_hidden_dim(dim, multiple_of, ffn_dim_multiplier)
    keys = jax.random.split(key, 2 + n_layers)

    def nrm(k, shape):
        # bf16 weights (pre-cast once) for native MXU throughput; fp32 accumulate in-kernel.
        return (jax.random.normal(k, shape, jnp.float32) * 0.02).astype(jnp.bfloat16)

    # Pre-pad tiled weight dims to tile multiples once, so forward never pads weights.
    tn, thd = _CFG["tn"], _CFG["thd"]
    vocab_pad = vocab if vocab <= tn else _round_up(vocab, tn)
    hd_pad = hd if hd <= thd else _round_up(hd, thd)

    params = {
        "dim": dim,
        "vocab": vocab,
        "tok_emb": nrm(keys[0], (vocab, dim)),
        "out_t":   _pad_axis(nrm(keys[1], (dim, vocab)), vocab_pad, 1),
        "norm_w":  jnp.ones((dim,), jnp.float32),
        "layers":  [],
    }
    for l in range(n_layers):
        lk = jax.random.split(keys[2 + l], 7)
        wq = nrm(lk[0], (dim, dim))
        wk = nrm(lk[1], (dim, dim))
        wv = nrm(lk[2], (dim, dim))
        params["layers"].append({
            "attn_norm_w": jnp.ones((dim,), jnp.float32),
            "ffn_norm_w":  jnp.ones((dim,), jnp.float32),
            "wqkv_t": jnp.concatenate([wq, wk, wv], axis=1),   # fused (dim, 3*dim)
            "wo_t": nrm(lk[3], (dim, dim)),
            "w1_t": _pad_axis(nrm(lk[4], (dim, hd)), hd_pad, 1),
            "w3_t": _pad_axis(nrm(lk[5], (dim, hd)), hd_pad, 1),
            "w2_t": _pad_axis(nrm(lk[6], (hd, dim)), hd_pad, 0),
        })
    return params


def transformer_decoder_forward(params, tokens, start_pos, *, n_heads, norm_eps,
                                freqs_cos, freqs_sin):
    b, s = tokens.shape
    dim = params["dim"]
    dh = dim // n_heads
    scale = 1.0 / math.sqrt(dh)

    h = jnp.take(params["tok_emb"], tokens, axis=0).reshape(b * s, dim)  # bf16
    cos = freqs_cos[start_pos:start_pos + s]
    sin = freqs_sin[start_pos:start_pos + s]

    # TODO(synk): KV-cache write/read for incremental decoding is not modeled;
    # this reproduces the prefill path (keys/values come from the current chunk),
    # with the causal mask exactly matching triu(diagonal=start_pos+1).
    for layer in params["layers"]:
        # Fused RMSNorm + QKV projection (one kernel, one fused weight).
        qkv = rmsnorm_linear(h, layer["attn_norm_w"], layer["wqkv_t"],
                             norm_eps, jnp.bfloat16)
        q2d, k2d, v2d = jnp.split(qkv, 3, axis=-1)

        # RoPE in (B, S, H, Dh); reshape back to (B, S, D) is a free view — no
        # (0,2,1,3) transposes, the attention kernel consumes this layout directly.
        q = apply_rotary_emb(q2d.reshape(b, s, n_heads, dh), cos, sin,
                             scale=scale).reshape(b, s, dim)
        k = apply_rotary_emb(k2d.reshape(b, s, n_heads, dh), cos, sin
                             ).reshape(b, s, dim)
        v = v2d.reshape(b, s, dim)

        ao = flash_attention(q, k, v, n_heads=n_heads, start_pos=start_pos)

        # wo projection with the residual add fused in (consumes (B,S,D) directly).
        h = linear_residual(ao.reshape(b * s, dim), layer["wo_t"], h)

        # Fused RMSNorm + SwiGLU FFN + residual, hidden-dim tiled.
        h = swiglu_ffn(h, layer["ffn_norm_w"], layer["w1_t"], layer["w3_t"],
                       layer["w2_t"], norm_eps)

    # Final RMSNorm fused into the (vocab-tiled) output head; large row tile so
    # the (D, vocab) weight is streamed from HBM as few times as possible.
    logits = rmsnorm_linear(h, params["norm_w"], params["out_t"],
                            norm_eps, jnp.float32, tm=_CFG["tm_head"])
    logits = logits[:, :params["vocab"]]      # drop pre-padded vocab columns
    return logits.reshape(b, s, -1)


# ---------------------------------------------------------------------------
if __name__ == "__main__":
    # Small config consistent with the module's __init__.
    vocab_len = 64
    embedding_dim = 32
    num_layers = 2
    num_attention_heads = 4
    norm_eps = 1e-5
    max_batch_size = 2
    max_seq_len = 16
    multiple_of = 16
    ffn_dim_multiplier = 1

    batch, seqlen = 2, 8
    start_pos = 0

    key = jax.random.PRNGKey(0)
    pkey, tkey = jax.random.split(key)
    params = init_params(pkey, vocab_len, embedding_dim, num_layers,
                         multiple_of, ffn_dim_multiplier)
    freqs_cos, freqs_sin = precompute_freqs_cis(
        embedding_dim // num_attention_heads, max_seq_len * 2)

    tokens = jax.random.randint(tkey, (batch, seqlen), 0, vocab_len,
                                dtype=jnp.int32)

    logits = transformer_decoder_forward(
        params, tokens, start_pos,
        n_heads=num_attention_heads, norm_eps=norm_eps,
        freqs_cos=freqs_cos, freqs_sin=freqs_sin)
    logits = jax.block_until_ready(logits)

    assert logits.shape == (batch, seqlen, vocab_len)
    assert logits.dtype == jnp.float32
    assert bool(jnp.all(jnp.isfinite(logits)))
    print("KERNEL_OK")
</pallas_src>

<mosaic_0001>
module attributes {stable_mosaic.version = 11 : i64} {
  func.func @_rmsnorm_matmul_kernel(%arg0: i32, %arg1: i32, %arg2: memref<16x32xbf16, #tpu.memory_space<vmem>>, %arg3: memref<1x32xf32, #tpu.memory_space<vmem>>, %arg4: memref<32x96xbf16, #tpu.memory_space<vmem>>, %arg5: memref<16x96xbf16, #tpu.memory_space<vmem>>, %arg6: memref<16x32xbf16, #tpu.memory_space<vmem>>) attributes {dimension_semantics = [#tpu.dimension_semantics<parallel>, #tpu.dimension_semantics<arbitrary>], iteration_bounds = array<i64: 1, 1>, scalar_prefetch = 0 : i64, scratch_operands = 1 : i64, tpu.core_type = #tpu.core_type<tc>, window_params = [{transform_indices = @transform_0, window_bounds = array<i64: 16, 32>}, {pipeline_mode = #tpu.pipeline_mode<synchronous>, transform_indices = @transform_1, window_bounds = array<i64: 1, 32>}, {transform_indices = @transform_2, window_bounds = array<i64: 32, 96>}, {transform_indices = @transform_3, window_bounds = array<i64: 16, 96>}]} {
    %c0_i32 = arith.constant 0 : i32
    %0 = arith.cmpi eq, %arg1, %c0_i32 : i32
    %1 = arith.extui %0 : i1 to i32
    %c0_i32_0 = arith.constant 0 : i32
    %2 = arith.cmpi ne, %1, %c0_i32_0 : i32
    scf.if %2 {
      %c0_6 = arith.constant 0 : index
      %c0_7 = arith.constant 0 : index
      %8 = vector.load %arg2[%c0_6, %c0_7] : memref<16x32xbf16, #tpu.memory_space<vmem>>, vector<16x32xbf16>
      %9 = arith.extf %8 : vector<16x32xbf16> to vector<16x32xf32>
      %10 = arith.mulf %9, %9 : vector<16x32xf32>
      %cst_8 = arith.constant dense<0.000000e+00> : vector<16xf32>
      %11 = vector.multi_reduction <add>, %10, %cst_8 [1] : vector<16x32xf32> to vector<16xf32>
      %12 = vector.shape_cast %11 : vector<16xf32> to vector<16x1xf32>
      %cst_9 = arith.constant 3.200000e+01 : f32
      %13 = vector.broadcast %cst_9 : f32 to vector<16x1xf32>
      %14 = arith.divf %12, %13 : vector<16x1xf32>
      %cst_10 = arith.constant 9.99999974E-6 : f32
      %15 = vector.broadcast %cst_10 : f32 to vector<16x1xf32>
      %16 = arith.addf %14, %15 : vector<16x1xf32>
      %17 = math.rsqrt %16 : vector<16x1xf32>
      %18 = vector.broadcast %17 : vector<16x1xf32> to vector<16x32xf32>
      %19 = arith.mulf %9, %18 : vector<16x32xf32>
      %c0_11 = arith.constant 0 : index
      %c0_12 = arith.constant 0 : index
      %20 = vector.load %arg3[%c0_11, %c0_12] : memref<1x32xf32, #tpu.memory_space<vmem>>, vector<1x32xf32>
      %21 = vector.broadcast %20 : vector<1x32xf32> to vector<16x32xf32>
      %22 = arith.mulf %19, %21 : vector<16x32xf32>
      %23 = arith.truncf %22 : vector<16x32xf32> to vector<16x32xbf16>
      %c0_13 = arith.constant 0 : index
      %c0_14 = arith.constant 0 : index
      %24 = vector.load %arg6[%c0_13, %c0_14] : memref<16x32xbf16, #tpu.memory_space<vmem>>, vector<16x32xbf16>
      tpu.vector_store %arg6[%c0_13, %c0_14], %23 {strides = array<i32>} : memref<16x32xbf16, #tpu.memory_space<vmem>>, vector<16x32xbf16>,
    } else {
    }
    %c0 = arith.constant 0 : index
    %c0_1 = arith.constant 0 : index
    %3 = vector.load %arg6[%c0, %c0_1] : memref<16x32xbf16, #tpu.memory_space<vmem>>, vector<16x32xbf16>
    %c0_2 = arith.constant 0 : index
    %c0_3 = arith.constant 0 : index
    %4 = vector.load %arg4[%c0_2, %c0_3] : memref<32x96xbf16, #tpu.memory_space<vmem>>, vector<32x96xbf16>
    %cst = arith.constant dense<0.000000e+00> : vector<16x96xf32>
    %5 = tpu.matmul %3, %4, %cst {dimension_numbers = #tpu.dot_dimension_numbers<[1], [0], [0], [1], [0, 0, 1, 1], [], []>} : vector<16x32xbf16>, vector<32x96xbf16>, vector<16x96xf32> -> vector<16x96xf32>
    %6 = arith.truncf %5 : vector<16x96xf32> to vector<16x96xbf16>
    %c0_4 = arith.constant 0 : index
    %c0_5 = arith.constant 0 : index
    %7 = vector.load %arg5[%c0_4, %c0_5] : memref<16x96xbf16, #tpu.memory_space<vmem>>, vector<16x96xbf16>
    tpu.vector_store %arg5[%c0_4, %c0_5], %6 {strides = array<i32>} : memref<16x96xbf16, #tpu.memory_space<vmem>>, vector<16x96xbf16>,
    return
  }
  func.func @transform_0(%arg0: i32, %arg1: i32) -> (i32, i32) {
    %c0_i32 = arith.constant 0 : i32
    %c0_i32_0 = arith.constant 0 : i32
    return %arg0, %c0_i32 : i32, i32
  }
  func.func @transform_1(%arg0: i32, %arg1: i32) -> (i32, i32) {
    %c0_i32 = arith.constant 0 : i32
    %c0_i32_0 = arith.constant 0 : i32
    %c0_i32_1 = arith.constant 0 : i32
    return %c0_i32, %c0_i32_0 : i32, i32
  }
  func.func @transform_2(%arg0: i32, %arg1: i32) -> (i32, i32) {
    %c0_i32 = arith.constant 0 : i32
    %c0_i32_0 = arith.constant 0 : i32
    return %c0_i32, %arg1 : i32, i32
  }
  func.func @transform_3(%arg0: i32, %arg1: i32) -> (i32, i32) {
    %c0_i32 = arith.constant 0 : i32
    return %arg0, %arg1 : i32, i32
  }
}

</mosaic_0001>

<llo_original>
// kernel: tpu_custom_call.1
$region0: #{tpu_custom_call.1}
  #allocation0 [shape = 'u32[]', space=smem, size = 0x4, offset = 0x4, fixed_abs, tag = 'smem constant byte address 0x4 - core index']
  #allocation1 [shape = 'u32[72,128]{1,0:T(1,128)}', space=vmem, size = 0x9000, scoped, tag = 'internal scratch']
  #allocation2 [shape = 'bf16[16,32]{1,0:T(8,128)(2,1)}', space=vmem, size = 0x1000, scoped, tag = 'scratch operand']
  %s0 = inlined_call_operand.hbm [shape: bf16[16,32], index: 0, kind: input, shape index: {}]
  %s1 = inlined_call_operand.hbm [shape: f32[1,32], index: 1, kind: input, shape index: {}]
  %s2 = inlined_call_operand.hbm [shape: bf16[32,96], index: 2, kind: input, shape index: {}]
  %s3 = inlined_call_operand.hbm [shape: bf16[16,96], index: 3, kind: output, shape index: {}]
  %s4 = sld [smem:[#allocation0]]
  $region38: #{tpu_custom_call.1} parent=0
    _
  %s6 = ssub.s32 1, %s4
  %s7 = scalar_select 0, %s6, %s4
  $region1: #{tpu_custom_call.1} parent=0
    #allocation3 [shape = 'u8[4096]{0}', space=vmem, size = 0x1000, scoped, tag = 'input window, operand 0, single buffered']
    #allocation4 [shape = 's32[1]{0}', space=sflag, size = 0x4, scoped, tag = 'scoped memory for tpu_custom_call.1']
    #allocation5 [shape = 's32[1]{0}', space=sflag, size = 0x4, scoped, tag = 'scoped memory for tpu_custom_call.1']
    #allocation6 [shape = 'u8[512]{0}', space=vmem, size = 0x400, scoped, tag = 'input window, operand 1, single buffered']
    #allocation7 [shape = 's32[1]{0}', space=sflag, size = 0x4, scoped, tag = 'scoped memory for tpu_custom_call.1']
    #allocation8 [shape = 'u8[8192]{0}', space=vmem, size = 0x2000, scoped, tag = 'input window, operand 2, single buffered']
    #allocation9 [shape = 'u8[4096]{0}', space=vmem, size = 0x1000, scoped, tag = 'output window, operand 0, single buffered']
    %8 = vsyncpa [#allocation4], 0
    %9 = vsyncpa [#allocation7], 0
    %10 = vsyncpa [#allocation5], 0
    // Predicated region
    $region2: #{tpu_custom_call.1} parent=1 // pred_check
      _
    $region3: #{tpu_custom_call.1} parent=1 // pred_check_branch
      %12 = sbr.rel (0) target = $region5
    $region4: #{tpu_custom_call.1} parent=1 // pred_region
      %14 = vsyncadd [#allocation4], 0
      %s15 = sshll.u32 %s0, 4
      %s16 = int_to_ptr.hbm [resolvable:$true] %s15
      %s17 = sshll.u32 [#allocation3], 4
      %s18 = int_to_ptr.vmem [resolvable:$true] %s17
      %23 = dma.hbm_to_vmem [thread:$0]  %s16, 128, %s18, [#allocation4], 64, 64, 4
    $region5: #{tpu_custom_call.1} parent=1 // pred_fallthru
      _
    // Predicated region
    $region6: #{tpu_custom_call.1} parent=1 // pred_check
      _
    $region7: #{tpu_custom_call.1} parent=1 // pred_check_branch
      %25 = sbr.rel (0) target = $region9
    $region8: #{tpu_custom_call.1} parent=1 // pred_region
      %27 = vsyncadd [#allocation7], 0
      %s29 = sshll.u32 %s1, 4
      %s30 = int_to_ptr.hbm [resolvable:$true] %s29
      %s31 = sshll.u32 [#allocation6], 4
      %s32 = int_to_ptr.vmem [resolvable:$true] %s31
      %34 = dma.hbm_to_vmem [thread:$0]  %s30, 16, %s32, [#allocation7]
    $region9: #{tpu_custom_call.1} parent=1 // pred_fallthru
      _
    // Predicated region
    $region10: #{tpu_custom_call.1} parent=1 // pred_check
      _
    $region11: #{tpu_custom_call.1} parent=1 // pred_check_branch
      %36 = sbr.rel (0) target = $region13
    $region12: #{tpu_custom_call.1} parent=1 // pred_region
      %38 = vsyncadd [#allocation7], 0
      %s39 = sshll.u32 %s2, 4
      %s40 = int_to_ptr.hbm [resolvable:$true] %s39
      %s41 = sshll.u32 [#allocation8], 4
      %s42 = int_to_ptr.vmem [resolvable:$true] %s41
      %47 = dma.hbm_to_vmem [thread:$0]  %s40, 256, %s42, [#allocation7], 64, 64, 4
    $region13: #{tpu_custom_call.1} parent=1 // pred_fallthru
      _
    // Predicated region
    $region14: #{tpu_custom_call.1} parent=1 // pred_check
      _
    $region15: #{tpu_custom_call.1} parent=1 // pred_check_branch
      %49 = sbr.rel (0) target = $region17
    $region16: #{tpu_custom_call.1} parent=1 // pred_region
      %51 = dma.done [#allocation4], 128
    $region17: #{tpu_custom_call.1} parent=1 // pred_fallthru
      _
    // Predicated region
    $region18: #{tpu_custom_call.1} parent=1 // pred_check
      _
    $region19: #{tpu_custom_call.1} parent=1 // pred_check_branch
      %53 = sbr.rel (0) target = $region21
    $region20: #{tpu_custom_call.1} parent=1 // pred_region
      %55 = dma.done [#allocation7], 16
    $region21: #{tpu_custom_call.1} parent=1 // pred_fallthru
      _
    // Predicated region
    $region22: #{tpu_custom_call.1} parent=1 // pred_check
      _
    $region23: #{tpu_custom_call.1} parent=1 // pred_check_branch
      %57 = sbr.rel (0) target = $region25
    $region24: #{tpu_custom_call.1} parent=1 // pred_region
      %59 = dma.done [#allocation7], 256
    $region25: #{tpu_custom_call.1} parent=1 // pred_fallthru
      _
    %p61 = scmp.eq.s32.totalorder 0, 0
    // Predicated region
    $region26: #{tpu_custom_call.1} parent=1 // pred_check
      %p62 = pneg %p61
    $region27: #{tpu_custom_call.1} parent=1 // pred_check_branch
      %64 = sbr.rel (%p62) target = $region29
    $region28: #{tpu_custom_call.1} parent=1 // pred_region
      %v65 = vld [vmem:[#allocation3] sm:$0xf]
      %v66 = vld [vmem:[#allocation3 + $0x4] sm:$0xf]
      %v67 = vunpack.c.l.bf16 %v65
      %v68 = vunpack.c.l.bf16 %v66
      %v69 = vmul.f32 %v67, %v67
      %v70 = vmul.f32 %v68, %v68
      %vm71 = vcmask 261120
      %v72 = vsel %vm71, %v69, 0.0
      %73 = vadd.xlane.f32.xlu0 %v72
      %v74 = vpop.xlane.xlu0 %73
      %v75 = vsel %vm71, %v70, 0.0
      %76 = vadd.xlane.f32.xlu0 %v75
      %v77 = vpop.xlane.xlu0 %76
      %v78 = vrcp.pop 32.0
      %v79 = vmul.f32 32.0, %v78
      %v80 = vsub.f32 1.0, %v79
      %v81 = vmul.f32 %v78, %v80
      %v82 = vadd.f32 %v78, %v81
      %vm83 = vweird.f32 %v78
      %v84 = vsel %vm83, %v78, %v82
      %v85 = vmul.f32 %v74, %v84
      %v86 = vmul.f32 %v77, %v84
      %v87 = vadd.f32 %v85, 1e-05
      %v88 = vadd.f32 %v86, 1e-05
      %v89 = vrsqrt.pop %v87
      %v90 = vmul.f32 %v89, %v87
      %v91 = vmul.f32 %v90, %v89
      %v92 = vmul.f32 0.5, %v91
      %v93 = vsub.f32 1.5, %v92
      %v94 = vmul.f32 %v89, %v93
      %vm95 = vweird.f32 %v87
      %vm96 = vweird.f32 %v89
      %vm97 = vmor %vm95, %vm96
      %v98 = vsel %vm97, %v89, %v94
      %v99 = vrsqrt.pop %v88
      %v100 = vmul.f32 %v99, %v88
      %v101 = vmul.f32 %v100, %v99
      %v102 = vmul.f32 0.5, %v101
      %v103 = vsub.f32 1.5, %v102
      %v104 = vmul.f32 %v99, %v103
      %vm105 = vweird.f32 %v88
      %vm106 = vweird.f32 %v99
      %vm107 = vmor %vm105, %vm106
      %v108 = vsel %vm107, %v99, %v104
      %v109 = vmul.f32 %v67, %v98
      %v110 = vmul.f32 %v68, %v108
      %v111 = vld [vmem:[#allocation6] sm:$0x1]
      %v113 = vperm.slane %v111, 0
      %v115 = vmul.f32 %v109, %v113
      %v116 = vmul.f32 %v110, %v113
      %v117 = vpack.c.bf16 %v115, %v115
      %v118 = vpack.c.bf16 %v116, %v116
      %vm119 = vcmask 257024
      %120 = vst.msk [vmem:[#allocation2] sm:$0xf] %vm119, %v117
      %121 = vst.msk [vmem:[#allocation2 + $0x4] sm:$0xf] %vm119, %v118
    $region29: #{tpu_custom_call.1} parent=1 // pred_fallthru
      _
    %v122 = vld [vmem:[#allocation2] sm:$0xf]
    %v123 = vld [vmem:[#allocation2 + $0x4] sm:$0xf]
    %v124 = vld [vmem:[#allocation8] sm:$0xf]
    %v125 = vld [vmem:[#allocation8 + $0x4] sm:$0xf]
    %v126 = vld [vmem:[#allocation8 + $0x8] sm:$0xf]
    %v127 = vld [vmem:[#allocation8 + $0xc] sm:$0xf]
    %v130 = vunpack.c.l.b16 %v122
    %v131 = vunpack.c.l.b16 %v123
    %v132 = vpack.c.b16 %v131, %v130
    %v137 = vunpack.c.l.b16 %v124
    %v138 = vunpack.c.l.b16 %v125
    %v139 = vunpack.c.l.b16 %v126
    %v140 = vunpack.c.l.b16 %v127
    %v141 = vpack.c.b16 %v138, %v137
    %v142 = vpack.c.b16 %v140, %v139
    %vm145 = vcmask 261120
    %v147 = vsel %vm145, %v132, 0
    %149 = vmatpush.bf16.msra.mxu0 0
    %150 = vmatpush.bf16.msra.mxu0 0
    %151 = vmatpush.bf16.msra.mxu0 0
    %152 = vmatpush.bf16.msra.mxu0 0
    %153 = vmatpush.bf16.msra.mxu0 0
    %154 = vmatpush.bf16.msra.mxu0 0
    %155 = vmatpush.bf16.msra.mxu0 %v142
    %156 = vmatpush.bf16.msra.mxu0 %v141
    %157 = vmatmul.bf16.gmra.mxu0 %v147
    %v158 = vpop.f32.mrf.mxu0
    %v159 = vadd.f32 0.0, %v158
    %v160 = vpop.f32.mrf.mxu0
    %v161 = vadd.f32 0.0, %v160
    %162 = vdwg.mxu0
    %v163 = vpack.c.bf16 %v159, %v159
    %v164 = vpack.c.bf16 %v161, %v161
    %vm165 = vcmask 781312
    %166 = vst.msk [vmem:[#allocation9] sm:$0xf] %vm165, %v163
    %167 = vst.msk [vmem:[#allocation9 + $0x4] sm:$0xf] %vm165, %v164
    // Predicated region
    $region30: #{tpu_custom_call.1} parent=1 // pred_check
      _
    $region31: #{tpu_custom_call.1} parent=1 // pred_check_branch
      %169 = sbr.rel (0) target = $region33
    $region32: #{tpu_custom_call.1} parent=1 // pred_region
      %171 = vsyncadd [#allocation5], 0
      %s172 = sshll.u32 [#allocation9], 4
      %s173 = int_to_ptr.vmem [resolvable:$true] %s172
      %s174 = sshll.u32 %s3, 4
      %s175 = int_to_ptr.hbm [resolvable:$true] %s174
      %180 = dma.vmem_to_hbm [thread:$0]  %s173, 128, %s175, [#allocation5], 64, 64, 4
    $region33: #{tpu_custom_call.1} parent=1 // pred_fallthru
      _
    // Predicated region
    $region34: #{tpu_custom_call.1} parent=1 // pred_check
      _
    $region35: #{tpu_custom_call.1} parent=1 // pred_check_branch
      %182 = sbr.rel (0) target = $region37
    $region36: #{tpu_custom_call.1} parent=1 // pred_region
      %184 = dma.done [#allocation5], 128
    $region37: #{tpu_custom_call.1} parent=1 // pred_fallthru
      _
    %185 = vsyncpa [#allocation4], 1
    %186 = vsyncpa [#allocation7], 1
    %187 = vsyncpa [#allocation5], 1

</llo_original>
